<compile_context>
chip_gen: v6e
topology: v6e:2x2x1
jax: 0.10.0
libtpu: 0.0.40
codegen_flags: <defaults>
</compile_context>

<pallas_src>
import numpy as np
import jax
import jax.numpy as jnp
from jax.experimental import pallas as pl
from jax.experimental.pallas import tpu as pltpu

EPS = 0.003
H1 = 256   # fcs1 out
H2 = 128   # fcs2 / fca1 / fc2 out


def critic_kernel(sa_ref,                    # (TB, S+A)  bf16 input block
                  w_sa_ref, b_sa_ref,        # (S+A, 384) bf16, (1, 384) f32  [fcs1|fca1]
                  w2_ref, b2_ref,            # (256, 128) bf16, (1, 128) f32  fcs2
                  w3s_ref, w3a_ref, b3_ref,  # (128, 128) bf16 x2, (1, 128) f32  fc2 (split)
                  w4_ref, b4_ref,            # (1, 128) f32, (1, 1) f32       fc3
                  out_ref):                  # (1, TB) f32  lane-dense output row
    sa = sa_ref[...]                                            # already bf16

    # Fused first layer: [state|action] @ blockdiag(W_fcs1^T, W_fca1^T)
    #   -> [s1_pre | a1_pre]; bias add + ReLU in f32 on the VPU.
    h = jnp.dot(sa, w_sa_ref[...],
                preferred_element_type=jnp.float32) + b_sa_ref[...]
    h = jnp.maximum(h, 0.0)
    s1 = h[:, :H1].astype(jnp.bfloat16)      # (TB, 256), 128-aligned slice
    a1 = h[:, H1:].astype(jnp.bfloat16)      # (TB, 128)

    # s2 = relu(fcs2(s1))
    s2 = jnp.dot(s1, w2_ref[...],
                 preferred_element_type=jnp.float32) + b2_ref[...]
    s2 = jnp.maximum(s2, 0.0).astype(jnp.bfloat16)

    # x = relu(fc2(cat(s2, a1))) as two accumulated K=128 dots -- avoids the
    # (TB, 256) lane-concat intermediate; the a1 dot is independent of fcs2.
    x = (jnp.dot(s2, w3s_ref[...], preferred_element_type=jnp.float32)
         + jnp.dot(a1, w3a_ref[...], preferred_element_type=jnp.float32)
         + b3_ref[...])
    x = jnp.maximum(x, 0.0)

    # q = fc3(x): N=1 output -> VPU multiply + cross-lane reduce (rides the XLU
    # slot, no wasted MXU pass), emitted as a lane-dense (1, TB) row.
    q = jnp.sum(x * w4_ref[...], axis=-1)[None, :] + b4_ref[...]
    out_ref[...] = q.astype(out_ref.dtype)


def _round_up(x, m):
    return ((x + m - 1) // m) * m


def _pick_tile(B):
    """Batch-tile rows per grid step (generation-aware)."""
    try:
        kind = jax.devices()[0].device_kind
    except Exception:
        kind = ""
    multi_tc = "7" in kind                  # v7x: 2 TensorCores per chip
    if multi_tc and B >= 128:
        # >= 2 grid steps so dimension_semantics=("parallel",) actually shards
        # the batch across both TensorCores.
        return min(512, _round_up(pl.cdiv(B, 2), 8))
    # Single-TC (v5e/v6e) or tiny batch: biggest tile that amortizes the
    # ~0.35us per-grid-step overhead.  VMEM stays far under the scoped limit.
    return B if B <= 1024 else 1024


def critic_forward(state, action, params):
    B, S = state.shape
    A = action.shape[1]
    SA = S + A

    # Concatenate + cast to bf16 once on the XLA side: halves the streaming
    # HBM->VMEM bytes and removes a full-tile VPU convert from the kernel.
    sa = jnp.concatenate([state, action], axis=1).astype(jnp.bfloat16)

    TB = _pick_tile(B)
    num_tiles = pl.cdiv(B, TB)

    # Advisory cost so XLA can overlap this small call with its neighbours.
    flops = 2 * B * (SA * (H1 + H2) + H1 * H2 + 2 * H2 * H2 + H2)
    bytes_accessed = (B * SA * 2 + num_tiles * TB * 4                    # in/out
                      + (SA * (H1 + H2) + H1 * H2 + 2 * H2 * H2) * 2     # bf16 W
                      + ((H1 + H2) + H2 + H2 + H2 + 1) * 4)              # f32 b/w4

    def wspec(shape):
        # Weights / biases: same block every grid step -> stay VMEM resident.
        return pl.BlockSpec(shape, lambda i: (0, 0))

    out = pl.pallas_call(
        critic_kernel,
        out_shape=jax.ShapeDtypeStruct((num_tiles, TB), jnp.float32),
        grid=(num_tiles,),
        in_specs=[
            pl.BlockSpec((TB, SA), lambda i: (i, 0)),          # [state|action]
            wspec((SA, H1 + H2)), wspec((1, H1 + H2)),         # fused fcs1/fca1
            wspec((H1, H2)),      wspec((1, H2)),              # fcs2
            wspec((H2, H2)), wspec((H2, H2)), wspec((1, H2)),  # fc2 split halves
            wspec((1, H2)),       wspec((1, 1)),               # fc3 row + bias
        ],
        out_specs=pl.BlockSpec((1, TB), lambda i: (i, 0)),     # lane-dense row
        compiler_params=pltpu.CompilerParams(
            dimension_semantics=("parallel",),                 # shard batch over TCs
        ),
        cost_estimate=pl.CostEstimate(
            flops=flops, transcendentals=0, bytes_accessed=bytes_accessed),
    )(sa, params["w_sa"], params["b_sa"], params["w2"], params["b2"],
      params["w3s"], params["w3a"], params["b3"], params["w4"], params["b4"])

    # (num_tiles, TB) row-major == batch order; drop tail padding, back to (B, 1).
    return out.reshape(-1)[:B].reshape(B, 1)


def init_logical_params(key, state_dim, action_dim):
    """Deterministic init mirroring the PyTorch module.

    nn.Linear stores weight as (out, in); fanin_init uses size[0]
    (= out_features) as fanin -- that quirk of the original code is reproduced.
    Biases use torch's default uniform(-1/sqrt(in), 1/sqrt(in)).
    """
    ks = jax.random.split(key, 10)

    def uni(k, shape, v):
        return jax.random.uniform(k, shape, jnp.float32, minval=-v, maxval=v)

    return {
        "w_fcs1": uni(ks[0], (H1, state_dim), 1.0 / np.sqrt(H1)),
        "b_fcs1": uni(ks[1], (H1,), 1.0 / np.sqrt(state_dim)),
        "w_fcs2": uni(ks[2], (H2, H1), 1.0 / np.sqrt(H2)),
        "b_fcs2": uni(ks[3], (H2,), 1.0 / np.sqrt(H1)),
        "w_fca1": uni(ks[4], (H2, action_dim), 1.0 / np.sqrt(H2)),
        "b_fca1": uni(ks[5], (H2,), 1.0 / np.sqrt(action_dim)),
        "w_fc2":  uni(ks[6], (H2, 2 * H2), 1.0 / np.sqrt(H2)),
        "b_fc2":  uni(ks[7], (H2,), 1.0 / np.sqrt(2 * H2)),
        "w_fc3":  uni(ks[8], (1, H2), EPS),
        "b_fc3":  uni(ks[9], (1,), 1.0 / np.sqrt(H2)),
    }


def pack_params(p, state_dim, action_dim):
    """Pack logical (PyTorch-layout) params into the kernel's bf16 layout."""
    SA = state_dim + action_dim
    # Block-diagonal fused fcs1/fca1 weight: rows = [state|action] features,
    # cols = [s1 (256) | a1 (128)].  Only worth it while S+A is small; if
    # state_dim+action_dim grows past ~128 the zero block starts wasting MXU
    # flops and the two layers should be fed as separate dots instead.
    w_sa = jnp.zeros((SA, H1 + H2), jnp.float32)
    w_sa = w_sa.at[:state_dim, :H1].set(p["w_fcs1"].T)
    w_sa = w_sa.at[state_dim:, H1:].set(p["w_fca1"].T)
    b_sa = jnp.concatenate([p["b_fcs1"], p["b_fca1"]]).reshape(1, H1 + H2)
    # fc2 split into its s2 / a1 halves (two accumulated K=128 dots in-kernel).
    w3 = p["w_fc2"].T                                     # (256, 128)
    return {
        "w_sa": w_sa.astype(jnp.bfloat16),
        "b_sa": b_sa,                                     # f32
        "w2":  p["w_fcs2"].T.astype(jnp.bfloat16),        # (256, 128)
        "b2":  p["b_fcs2"].reshape(1, H2),
        "w3s": w3[:H2, :].astype(jnp.bfloat16),           # (128, 128) s2 half
        "w3a": w3[H2:, :].astype(jnp.bfloat16),           # (128, 128) a1 half
        "b3":  p["b_fc2"].reshape(1, H2),
        "w4":  p["w_fc3"].reshape(1, H2),                 # f32 row for VPU reduce
        "b4":  p["b_fc3"].reshape(1, 1),
    }


def critic_ref_logical(state, action, p):
    """Exact PyTorch Critic.forward math from the logical (out, in) weights."""
    s1 = jax.nn.relu(state @ p["w_fcs1"].T + p["b_fcs1"])
    s2 = jax.nn.relu(s1 @ p["w_fcs2"].T + p["b_fcs2"])
    a1 = jax.nn.relu(action @ p["w_fca1"].T + p["b_fca1"])
    x = jnp.concatenate([s2, a1], axis=1)
    x = jax.nn.relu(x @ p["w_fc2"].T + p["b_fc2"])
    return x @ p["w_fc3"].T + p["b_fc3"]


def critic_ref_packed(state, action, kp):
    """Mirror of the kernel math (bf16 weights/input upcast, f32 activations)."""
    sa = jnp.concatenate([state, action], axis=1).astype(jnp.bfloat16)
    sa = sa.astype(jnp.float32)
    h = jax.nn.relu(sa @ kp["w_sa"].astype(jnp.float32) + kp["b_sa"])
    s1, a1 = h[:, :H1], h[:, H1:]
    s2 = jax.nn.relu(s1 @ kp["w2"].astype(jnp.float32) + kp["b2"])
    x = jax.nn.relu(s2 @ kp["w3s"].astype(jnp.float32)
                    + a1 @ kp["w3a"].astype(jnp.float32) + kp["b3"])
    return x @ kp["w4"].T + kp["b4"]


if __name__ == "__main__":
    state_dim, action_dim, batch = 16, 4, 2
    key = jax.random.PRNGKey(0)
    kparam, kstate, kaction = jax.random.split(key, 3)

    logical = init_logical_params(kparam, state_dim, action_dim)
    params = pack_params(logical, state_dim, action_dim)

    state = jax.random.normal(kstate, (batch, state_dim), jnp.float32)
    action = jax.random.normal(kaction, (batch, action_dim), jnp.float32)

    out = jax.block_until_ready(critic_forward(state, action, params))
    assert out.shape == (batch, 1)

    # (1) Validate against the exact PyTorch-layout math in f32 -- catches any
    #     packing / transpose bug; tolerance covers bf16 weight+input quant.
    ref_logical = critic_ref_logical(state, action, logical)
    np.testing.assert_allclose(np.asarray(out), np.asarray(ref_logical),
                               rtol=5e-2, atol=5e-2)

    # (2) Validate against the packed (bf16-weight) reference -- tighter bound
    #     on the kernel mechanics themselves.
    ref_packed = critic_ref_packed(state, action, params)
    np.testing.assert_allclose(np.asarray(out), np.asarray(ref_packed),
                               rtol=2e-2, atol=2e-2)

    print("KERNEL_OK")
</pallas_src>

<mosaic_0001>
module attributes {stable_mosaic.version = 11 : i64} {
  func.func @critic_kernel(%arg0: i32, %arg1: memref<2x20xbf16, #tpu.memory_space<vmem>>, %arg2: memref<20x384xbf16, #tpu.memory_space<vmem>>, %arg3: memref<1x384xf32, #tpu.memory_space<vmem>>, %arg4: memref<256x128xbf16, #tpu.memory_space<vmem>>, %arg5: memref<1x128xf32, #tpu.memory_space<vmem>>, %arg6: memref<128x128xbf16, #tpu.memory_space<vmem>>, %arg7: memref<128x128xbf16, #tpu.memory_space<vmem>>, %arg8: memref<1x128xf32, #tpu.memory_space<vmem>>, %arg9: memref<1x128xf32, #tpu.memory_space<vmem>>, %arg10: memref<1x1xf32, #tpu.memory_space<vmem>>, %arg11: memref<1x2xf32, #tpu.memory_space<vmem>>) attributes {dimension_semantics = [#tpu.dimension_semantics<parallel>], iteration_bounds = array<i64: 1>, scalar_prefetch = 0 : i64, scratch_operands = 0 : i64, tpu.core_type = #tpu.core_type<tc>, window_params = [{transform_indices = @transform_0, window_bounds = array<i64: 2, 20>}, {pipeline_mode = #tpu.pipeline_mode<synchronous>, transform_indices = @transform_1, window_bounds = array<i64: 20, 384>}, {pipeline_mode = #tpu.pipeline_mode<synchronous>, transform_indices = @transform_2, window_bounds = array<i64: 1, 384>}, {pipeline_mode = #tpu.pipeline_mode<synchronous>, transform_indices = @transform_3, window_bounds = array<i64: 256, 128>}, {pipeline_mode = #tpu.pipeline_mode<synchronous>, transform_indices = @transform_4, window_bounds = array<i64: 1, 128>}, {pipeline_mode = #tpu.pipeline_mode<synchronous>, transform_indices = @transform_5, window_bounds = array<i64: 128, 128>}, {pipeline_mode = #tpu.pipeline_mode<synchronous>, transform_indices = @transform_6, window_bounds = array<i64: 128, 128>}, {pipeline_mode = #tpu.pipeline_mode<synchronous>, transform_indices = @transform_7, window_bounds = array<i64: 1, 128>}, {pipeline_mode = #tpu.pipeline_mode<synchronous>, transform_indices = @transform_8, window_bounds = array<i64: 1, 128>}, {pipeline_mode = #tpu.pipeline_mode<synchronous>, transform_indices = @transform_9, window_bounds = array<i64: 1, 1>}, {transform_indices = @transform_10, window_bounds = array<i64: 1, 2>}]} {
    %c0 = arith.constant 0 : index
    %c0_0 = arith.constant 0 : index
    %0 = vector.load %arg1[%c0, %c0_0] : memref<2x20xbf16, #tpu.memory_space<vmem>>, vector<2x20xbf16>
    %c0_1 = arith.constant 0 : index
    %c0_2 = arith.constant 0 : index
    %1 = vector.load %arg2[%c0_1, %c0_2] : memref<20x384xbf16, #tpu.memory_space<vmem>>, vector<20x384xbf16>
    %cst = arith.constant dense<0.000000e+00> : vector<2x384xf32>
    %2 = tpu.matmul %0, %1, %cst {dimension_numbers = #tpu.dot_dimension_numbers<[1], [0], [0], [1], [0, 0, 1, 1], [], []>} : vector<2x20xbf16>, vector<20x384xbf16>, vector<2x384xf32> -> vector<2x384xf32>
    %c0_3 = arith.constant 0 : index
    %c0_4 = arith.constant 0 : index
    %3 = vector.load %arg3[%c0_3, %c0_4] : memref<1x384xf32, #tpu.memory_space<vmem>>, vector<1x384xf32>
    %4 = vector.broadcast %3 : vector<1x384xf32> to vector<2x384xf32>
    %5 = arith.addf %2, %4 : vector<2x384xf32>
    %cst_5 = arith.constant 0.000000e+00 : f32
    %6 = vector.broadcast %cst_5 : f32 to vector<2x384xf32>
    %7 = arith.maximumf %5, %6 : vector<2x384xf32>
    %8 = vector.extract_strided_slice %7 {offsets = [0, 0], sizes = [2, 256], strides = [1, 1]} : vector<2x384xf32> to vector<2x256xf32>
    %9 = arith.truncf %8 : vector<2x256xf32> to vector<2x256xbf16>
    %10 = vector.extract_strided_slice %7 {offsets = [0, 256], sizes = [2, 128], strides = [1, 1]} : vector<2x384xf32> to vector<2x128xf32>
    %11 = arith.truncf %10 : vector<2x128xf32> to vector<2x128xbf16>
    %c0_6 = arith.constant 0 : index
    %c0_7 = arith.constant 0 : index
    %12 = vector.load %arg4[%c0_6, %c0_7] : memref<256x128xbf16, #tpu.memory_space<vmem>>, vector<256x128xbf16>
    %cst_8 = arith.constant dense<0.000000e+00> : vector<2x128xf32>
    %13 = tpu.matmul %9, %12, %cst_8 {dimension_numbers = #tpu.dot_dimension_numbers<[1], [0], [0], [1], [0, 0, 1, 1], [], []>} : vector<2x256xbf16>, vector<256x128xbf16>, vector<2x128xf32> -> vector<2x128xf32>
    %c0_9 = arith.constant 0 : index
    %c0_10 = arith.constant 0 : index
    %14 = vector.load %arg5[%c0_9, %c0_10] : memref<1x128xf32, #tpu.memory_space<vmem>>, vector<1x128xf32>
    %15 = vector.broadcast %14 : vector<1x128xf32> to vector<2x128xf32>
    %16 = arith.addf %13, %15 : vector<2x128xf32>
    %cst_11 = arith.constant 0.000000e+00 : f32
    %17 = vector.broadcast %cst_11 : f32 to vector<2x128xf32>
    %18 = arith.maximumf %16, %17 : vector<2x128xf32>
    %19 = arith.truncf %18 : vector<2x128xf32> to vector<2x128xbf16>
    %c0_12 = arith.constant 0 : index
    %c0_13 = arith.constant 0 : index
    %20 = vector.load %arg6[%c0_12, %c0_13] : memref<128x128xbf16, #tpu.memory_space<vmem>>, vector<128x128xbf16>
    %cst_14 = arith.constant dense<0.000000e+00> : vector<2x128xf32>
    %21 = tpu.matmul %19, %20, %cst_14 {dimension_numbers = #tpu.dot_dimension_numbers<[1], [0], [0], [1], [0, 0, 1, 1], [], []>} : vector<2x128xbf16>, vector<128x128xbf16>, vector<2x128xf32> -> vector<2x128xf32>
    %c0_15 = arith.constant 0 : index
    %c0_16 = arith.constant 0 : index
    %22 = vector.load %arg7[%c0_15, %c0_16] : memref<128x128xbf16, #tpu.memory_space<vmem>>, vector<128x128xbf16>
    %cst_17 = arith.constant dense<0.000000e+00> : vector<2x128xf32>
    %23 = tpu.matmul %11, %22, %cst_17 {dimension_numbers = #tpu.dot_dimension_numbers<[1], [0], [0], [1], [0, 0, 1, 1], [], []>} : vector<2x128xbf16>, vector<128x128xbf16>, vector<2x128xf32> -> vector<2x128xf32>
    %24 = arith.addf %21, %23 : vector<2x128xf32>
    %c0_18 = arith.constant 0 : index
    %c0_19 = arith.constant 0 : index
    %25 = vector.load %arg8[%c0_18, %c0_19] : memref<1x128xf32, #tpu.memory_space<vmem>>, vector<1x128xf32>
    %26 = vector.broadcast %25 : vector<1x128xf32> to vector<2x128xf32>
    %27 = arith.addf %24, %26 : vector<2x128xf32>
    %cst_20 = arith.constant 0.000000e+00 : f32
    %28 = vector.broadcast %cst_20 : f32 to vector<2x128xf32>
    %29 = arith.maximumf %27, %28 : vector<2x128xf32>
    %c0_21 = arith.constant 0 : index
    %c0_22 = arith.constant 0 : index
    %30 = vector.load %arg9[%c0_21, %c0_22] : memref<1x128xf32, #tpu.memory_space<vmem>>, vector<1x128xf32>
    %31 = vector.broadcast %30 : vector<1x128xf32> to vector<2x128xf32>
    %32 = arith.mulf %29, %31 : vector<2x128xf32>
    %cst_23 = arith.constant dense<0.000000e+00> : vector<2xf32>
    %33 = vector.multi_reduction <add>, %32, %cst_23 [1] : vector<2x128xf32> to vector<2xf32>
    %34 = vector.shape_cast %33 : vector<2xf32> to vector<1x2xf32>
    %c0_24 = arith.constant 0 : index
    %c0_25 = arith.constant 0 : index
    %35 = vector.load %arg10[%c0_24, %c0_25] : memref<1x1xf32, #tpu.memory_space<vmem>>, vector<1x1xf32>
    %36 = vector.broadcast %35 : vector<1x1xf32> to vector<1x2xf32>
    %37 = arith.addf %34, %36 : vector<1x2xf32>
    %c0_26 = arith.constant 0 : index
    %c0_27 = arith.constant 0 : index
    %38 = vector.load %arg11[%c0_26, %c0_27] : memref<1x2xf32, #tpu.memory_space<vmem>>, vector<1x2xf32>
    tpu.vector_store %arg11[%c0_26, %c0_27], %37 {strides = array<i32>} : memref<1x2xf32, #tpu.memory_space<vmem>>, vector<1x2xf32>,
    return
  }
  func.func @transform_0(%arg0: i32) -> (i32, i32) {
    %c0_i32 = arith.constant 0 : i32
    %c0_i32_0 = arith.constant 0 : i32
    return %arg0, %c0_i32 : i32, i32
  }
  func.func @transform_1(%arg0: i32) -> (i32, i32) {
    %c0_i32 = arith.constant 0 : i32
    %c0_i32_0 = arith.constant 0 : i32
    %c0_i32_1 = arith.constant 0 : i32
    return %c0_i32, %c0_i32_0 : i32, i32
  }
  func.func @transform_2(%arg0: i32) -> (i32, i32) {
    %c0_i32 = arith.constant 0 : i32
    %c0_i32_0 = arith.constant 0 : i32
    %c0_i32_1 = arith.constant 0 : i32
    return %c0_i32, %c0_i32_0 : i32, i32
  }
  func.func @transform_3(%arg0: i32) -> (i32, i32) {
    %c0_i32 = arith.constant 0 : i32
    %c0_i32_0 = arith.constant 0 : i32
    %c0_i32_1 = arith.constant 0 : i32
    return %c0_i32, %c0_i32_0 : i32, i32
  }
  func.func @transform_4(%arg0: i32) -> (i32, i32) {
    %c0_i32 = arith.constant 0 : i32
    %c0_i32_0 = arith.constant 0 : i32
    %c0_i32_1 = arith.constant 0 : i32
    return %c0_i32, %c0_i32_0 : i32, i32
  }
  func.func @transform_5(%arg0: i32) -> (i32, i32) {
    %c0_i32 = arith.constant 0 : i32
    %c0_i32_0 = arith.constant 0 : i32
    %c0_i32_1 = arith.constant 0 : i32
    return %c0_i32, %c0_i32_0 : i32, i32
  }
  func.func @transform_6(%arg0: i32) -> (i32, i32) {
    %c0_i32 = arith.constant 0 : i32
    %c0_i32_0 = arith.constant 0 : i32
    %c0_i32_1 = arith.constant 0 : i32
    return %c0_i32, %c0_i32_0 : i32, i32
  }
  func.func @transform_7(%arg0: i32) -> (i32, i32) {
    %c0_i32 = arith.constant 0 : i32
    %c0_i32_0 = arith.constant 0 : i32
    %c0_i32_1 = arith.constant 0 : i32
    return %c0_i32, %c0_i32_0 : i32, i32
  }
  func.func @transform_8(%arg0: i32) -> (i32, i32) {
    %c0_i32 = arith.constant 0 : i32
    %c0_i32_0 = arith.constant 0 : i32
    %c0_i32_1 = arith.constant 0 : i32
    return %c0_i32, %c0_i32_0 : i32, i32
  }
  func.func @transform_9(%arg0: i32) -> (i32, i32) {
    %c0_i32 = arith.constant 0 : i32
    %c0_i32_0 = arith.constant 0 : i32
    %c0_i32_1 = arith.constant 0 : i32
    return %c0_i32, %c0_i32_0 : i32, i32
  }
  func.func @transform_10(%arg0: i32) -> (i32, i32) {
    %c0_i32 = arith.constant 0 : i32
    %c0_i32_0 = arith.constant 0 : i32
    return %arg0, %c0_i32 : i32, i32
  }
}

</mosaic_0001>

<llo_original>
// kernel: tpu_custom_call.1
$region0: #{tpu_custom_call.1}
  #allocation0 [shape = 'u32[]', space=smem, size = 0x4, offset = 0x4, fixed_abs, tag = 'smem constant byte address 0x4 - core index']
  #allocation1 [shape = 'u32[144,128]{1,0:T(1,128)}', space=vmem, size = 0x12000, scoped, tag = 'internal scratch']
  #allocation2 [shape = 'f32[1,1]{1,0:T(1,128)S(1)}', space=vmem, size = 0x200, scoped, tag = 'scoped memory for tpu_custom_call.1']
  %s0 = inlined_call_operand.vmem [shape: bf16[2,20], index: 0, kind: input, shape index: {}]
  %s1 = inlined_call_operand.hbm [shape: bf16[20,384], index: 1, kind: input, shape index: {}]
  %s2 = inlined_call_operand.vmem [shape: f32[1,384], index: 2, kind: input, shape index: {}]
  %s3 = inlined_call_operand.hbm [shape: bf16[256,128], index: 3, kind: input, shape index: {}]
  %s4 = inlined_call_operand.vmem [shape: f32[1,128], index: 4, kind: input, shape index: {}]
  %s5 = inlined_call_operand.hbm [shape: bf16[128,128], index: 5, kind: input, shape index: {}]
  %s6 = inlined_call_operand.hbm [shape: bf16[128,128], index: 6, kind: input, shape index: {}]
  %s7 = inlined_call_operand.vmem [shape: f32[1,128], index: 7, kind: input, shape index: {}]
  %s8 = inlined_call_operand.vmem [shape: f32[1,128], index: 8, kind: input, shape index: {}]
  %s9 = inlined_call_operand.<no memory space> [shape: f32[1,1], index: 9, kind: input, shape index: {}]
  %s10 = inlined_call_operand.hbm [shape: f32[1,2], index: 10, kind: output, shape index: {}]
  %s11 = sld [smem:[#allocation0]]
  $region66: #{tpu_custom_call.1} parent=0
    _
  %s13 = ssub.s32 1, %s11
  %s14 = scalar_select 0, %s13, %s11
  %v15 = vstv %s9
  %16 = vst [vmem:[#allocation2] sm:$0x1] %v15
  $region1: #{tpu_custom_call.1} parent=0
    #allocation3 [shape = 'u8[18432]{0}', space=vmem, size = 0x4800, scoped, tag = 'input window, operand 1, single buffered']
    #allocation4 [shape = 's32[1]{0}', space=sflag, size = 0x4, scoped, tag = 'scoped memory for tpu_custom_call.1']
    #allocation5 [shape = 's32[1]{0}', space=sflag, size = 0x4, scoped, tag = 'scoped memory for tpu_custom_call.1']
    #allocation6 [shape = 'u8[65536]{0}', space=vmem, size = 0x10000, scoped, tag = 'input window, operand 3, single buffered']
    #allocation7 [shape = 's32[1]{0}', space=sflag, size = 0x4, scoped, tag = 'scoped memory for tpu_custom_call.1']
    #allocation8 [shape = 'u8[32768]{0}', space=vmem, size = 0x8000, scoped, tag = 'input window, operand 5, single buffered']
    #allocation9 [shape = 'u8[32768]{0}', space=vmem, size = 0x8000, scoped, tag = 'input window, operand 6, single buffered']
    #allocation10 [shape = 's32[1]{0}', space=sflag, size = 0x4, scoped, tag = 'scoped memory for tpu_custom_call.1']
    #allocation11 [shape = 'u8[512]{0}', space=vmem, size = 0x400, scoped, tag = 'output window, operand 0, single buffered']
    %17 = vsyncpa [#allocation4], 0
    %18 = vsyncpa [#allocation7], 0
    %19 = vsyncpa [#allocation10], 0
    %20 = vsyncpa [#allocation5], 0
    // Predicated region
    $region2: #{tpu_custom_call.1} parent=1 // pred_check
      _
    $region3: #{tpu_custom_call.1} parent=1 // pred_check_branch
      %22 = sbr.rel (0) target = $region5
    $region4: #{tpu_custom_call.1} parent=1 // pred_region
      _
    $region5: #{tpu_custom_call.1} parent=1 // pred_fallthru
      _
    // Predicated region
    $region6: #{tpu_custom_call.1} parent=1 // pred_check
      _
    $region7: #{tpu_custom_call.1} parent=1 // pred_check_branch
      %24 = sbr.rel (0) target = $region9
    $region8: #{tpu_custom_call.1} parent=1 // pred_region
      %s26 = ssub.s32 576, 576
      %27 = vsyncadd [#allocation4], %s26
      %s28 = sshll.u32 [#allocation3], 4
      %s29 = int_to_ptr.vmem [resolvable:$true] %s28
      %34 = dma.hbm_to_vmem [thread:$0]  %s1, 576, %s29, [#allocation4], 192, 192, 12
    $region9: #{tpu_custom_call.1} parent=1 // pred_fallthru
      _
    // Predicated region
    $region10: #{tpu_custom_call.1} parent=1 // pred_check
      _
    $region11: #{tpu_custom_call.1} parent=1 // pred_check_branch
      %36 = sbr.rel (0) target = $region13
    $region12: #{tpu_custom_call.1} parent=1 // pred_region
      _
    $region13: #{tpu_custom_call.1} parent=1 // pred_fallthru
      _
    // Predicated region
    $region14: #{tpu_custom_call.1} parent=1 // pred_check
      _
    $region15: #{tpu_custom_call.1} parent=1 // pred_check_branch
      %38 = sbr.rel (0) target = $region17
    $region16: #{tpu_custom_call.1} parent=1 // pred_region
      %s40 = ssub.s32 2048, 2048
      %41 = vsyncadd [#allocation7], %s40
      %s42 = sshll.u32 [#allocation6], 4
      %s43 = int_to_ptr.vmem [resolvable:$true] %s42
      %48 = dma.hbm_to_vmem [thread:$0]  %s3, 2048, %s43, [#allocation7], 64, 64, 4
    $region17: #{tpu_custom_call.1} parent=1 // pred_fallthru
      _
    // Predicated region
    $region18: #{tpu_custom_call.1} parent=1 // pred_check
      _
    $region19: #{tpu_custom_call.1} parent=1 // pred_check_branch
      %50 = sbr.rel (0) target = $region21
    $region20: #{tpu_custom_call.1} parent=1 // pred_region
      _
    $region21: #{tpu_custom_call.1} parent=1 // pred_fallthru
      _
    // Predicated region
    $region22: #{tpu_custom_call.1} parent=1 // pred_check
      _
    $region23: #{tpu_custom_call.1} parent=1 // pred_check_branch
      %52 = sbr.rel (0) target = $region25
    $region24: #{tpu_custom_call.1} parent=1 // pred_region
      %s54 = ssub.s32 1024, 1024
      %55 = vsyncadd [#allocation7], %s54
      %s56 = sshll.u32 [#allocation8], 4
      %s57 = int_to_ptr.vmem [resolvable:$true] %s56
      %62 = dma.hbm_to_vmem [thread:$0]  %s5, 1024, %s57, [#allocation7], 64, 64, 4
    $region25: #{tpu_custom_call.1} parent=1 // pred_fallthru
      _
    // Predicated region
    $region26: #{tpu_custom_call.1} parent=1 // pred_check
      _
    $region27: #{tpu_custom_call.1} parent=1 // pred_check_branch
      %64 = sbr.rel (0) target = $region29
    $region28: #{tpu_custom_call.1} parent=1 // pred_region
      %s66 = ssub.s32 1024, 1024
      %67 = vsyncadd [#allocation10], %s66
      %s68 = sshll.u32 [#allocation9], 4
      %s69 = int_to_ptr.vmem [resolvable:$true] %s68
      %74 = dma.hbm_to_vmem [thread:$0]  %s6, 1024, %s69, [#allocation10], 64, 64, 4
    $region29: #{tpu_custom_call.1} parent=1 // pred_fallthru
      _
    // Predicated region
    $region30: #{tpu_custom_call.1} parent=1 // pred_check
      _
    $region31: #{tpu_custom_call.1} parent=1 // pred_check_branch
      %76 = sbr.rel (0) target = $region33
    $region32: #{tpu_custom_call.1} parent=1 // pred_region
      _
    $region33: #{tpu_custom_call.1} parent=1 // pred_fallthru
      _
    // Predicated region
    $region34: #{tpu_custom_call.1} parent=1 // pred_check
      _
    $region35: #{tpu_custom_call.1} parent=1 // pred_check_branch
      %78 = sbr.rel (0) target = $region37
    $region36: #{tpu_custom_call.1} parent=1 // pred_region
      _
    $region37: #{tpu_custom_call.1} parent=1 // pred_fallthru
      _
    // Predicated region
    $region38: #{tpu_custom_call.1} parent=1 // pred_check
      _
    $region39: #{tpu_custom_call.1} parent=1 // pred_check_branch
      %80 = sbr.rel (0) target = $region41
    $region40: #{tpu_custom_call.1} parent=1 // pred_region
      _
    $region41: #{tpu_custom_call.1} parent=1 // pred_fallthru
      _
    // Predicated region
    $region42: #{tpu_custom_call.1} parent=1 // pred_check
      _
    $region43: #{tpu_custom_call.1} parent=1 // pred_check_branch
      %82 = sbr.rel (0) target = $region45
    $region44: #{tpu_custom_call.1} parent=1 // pred_region
      %83 = dma.done [#allocation4], 576
    $region45: #{tpu_custom_call.1} parent=1 // pred_fallthru
      _
    // Predicated region
    $region46: #{tpu_custom_call.1} parent=1 // pred_check
      _
    $region47: #{tpu_custom_call.1} parent=1 // pred_check_branch
      %85 = sbr.rel (0) target = $region49
    $region48: #{tpu_custom_call.1} parent=1 // pred_region
      %86 = dma.done [#allocation7], 2048
    $region49: #{tpu_custom_call.1} parent=1 // pred_fallthru
      _
    // Predicated region
    $region50: #{tpu_custom_call.1} parent=1 // pred_check
      _
    $region51: #{tpu_custom_call.1} parent=1 // pred_check_branch
      %88 = sbr.rel (0) target = $region53
    $region52: #{tpu_custom_call.1} parent=1 // pred_region
      %89 = dma.done [#allocation7], 1024
    $region53: #{tpu_custom_call.1} parent=1 // pred_fallthru
      _
    // Predicated region
    $region54: #{tpu_custom_call.1} parent=1 // pred_check
      _
    $region55: #{tpu_custom_call.1} parent=1 // pred_check_branch
      %91 = sbr.rel (0) target = $region57
    $region56: #{tpu_custom_call.1} parent=1 // pred_region
      %92 = dma.done [#allocation10], 1024
    $region57: #{tpu_custom_call.1} parent=1 // pred_fallthru
      _
    %v94 = vld [vmem:[%s0] sm:$0x1]
    %v95 = vld [vmem:[#allocation3] sm:$0xff]
    %v96 = vld [vmem:[#allocation3 + $0x8] sm:$0xf]
    %v97 = vld [vmem:[#allocation3 + $0xc] sm:$0xff]
    %v98 = vld [vmem:[#allocation3 + $0x14] sm:$0xf]
    %v99 = vld [vmem:[#allocation3 + $0x18] sm:$0x33]
    %v100 = vld [vmem:[#allocation3 + $0x20] sm:$0x3]
    %v101 = vld [vmem:[%s2] sm:$0x7]
    %v103 = vlaneseq
    %v104 = vshrl.u32 %v103, 7
    %v105 = vsub.s32 0, %v104
    %v106 = vrot.slane %v101, %v105
    %v107 = vlaneseq
    %v108 = vshrl.u32 %v107, 7
    %v109 = vsub.s32 1, %v108
    %v110 = vrot.slane %v101, %v109
    %v111 = vlaneseq
    %v112 = vshrl.u32 %v111, 7
    %v113 = vsub.s32 2, %v112
    %v114 = vrot.slane %v101, %v113
    %v124 = vunpack.c.l.b16 %v95
    %v125 = vunpack.c.h.b16 %v95
    %v126 = vunpack.c.l.b16 %v96
    %v127 = vunpack.c.l.b16 %v97
    %v128 = vunpack.c.h.b16 %v97
    %v129 = vunpack.c.l.b16 %v98
    %v130 = vunpack.c.l.b16 %v99
    %v131 = vunpack.c.h.b16 %v99
    %v132 = vunpack.c.l.b16 %v100
    %v133 = vpack.c.b16 %v127, %v124
    %v134 = vpack.c.b16 %v128, %v125
    %v135 = vpack.c.b16 %v129, %v126
    %v136 = vpack.c.b16 %v130, %v130
    %v137 = vpack.c.b16 %v131, %v131
    %v138 = vpack.c.b16 %v132, %v132
    %vm142 = vcmask 162816
    %v144 = vsel %vm142, %v94, 0
    %vm146 = vcmask 1041408
    %v148 = vsel %vm146, %v136, 0
    %v151 = vsel %vm146, %v137, 0
    %v154 = vsel %vm146, %v138, 0
    %156 = vmatprep.subr.bf16.mxu0 0
    %157 = vmatpush1.bf16.msra.mxu0 0
    %158 = vmatprep.subr.bf16.mxu0 0
    %159 = vmatpush1.bf16.msra.mxu0 0
    %160 = vmatprep.subr.bf16.mxu0 0
    %161 = vmatpush1.bf16.msra.mxu0 0
    %162 = vmatprep.subr.bf16.mxu0 0
    %163 = vmatpush1.bf16.msra.mxu0 0
    %164 = vmatprep.subr.bf16.mxu0 0
    %165 = vmatpush1.bf16.msra.mxu0 0
    %166 = vmatprep.subr.bf16.mxu0 0
    %167 = vmatpush1.bf16.msra.mxu0 0
    %168 = vmatprep.subr.bf16.mxu0 %v151
    %169 = vmatpush1.bf16.msra.mxu0 %v148
    %170 = vmatprep.subr.bf16.mxu0 %v134
    %171 = vmatpush1.bf16.msra.mxu0 %v133
    %172 = vmatprep.subr.bf16.mxu0 0
    %173 = vmatpush2.bf16.msra.mxu0 0
    %174 = vmatprep.subr.bf16.mxu0 0
    %175 = vmatpush2.bf16.msra.mxu0 0
    %176 = vmatprep.subr.bf16.mxu0 0
    %177 = vmatpush2.bf16.msra.mxu0 0
    %178 = vmatprep.subr.bf16.mxu0 0
    %179 = vmatpush2.bf16.msra.mxu0 0
    %180 = vmatprep.subr.bf16.mxu0 0
    %181 = vmatpush2.bf16.msra.mxu0 0
    %182 = vmatprep.subr.bf16.mxu0 0
    %183 = vmatpush2.bf16.msra.mxu0 0
    %184 = vmatprep.subr.bf16.mxu0 0
    %185 = vmatpush2.bf16.msra.mxu0 0
    %186 = vmatprep.subr.bf16.mxu0 0
    %187 = vmatpush2.bf16.msra.mxu0 0
    %188 = vmatprep.mubr.bf16.mxu0 0
    %189 = vmatmul.mubr.bf16.gmra.mxu0 %v144
    %v190 = vpop.f32.mrf.mxu0
    %v191 = vadd.f32 %v106, %v190
    %v192 = vpop.f32.mrf.mxu0
    %v193 = vadd.f32 %v110, %v192
    %v194 = vpop.f32.mrf.mxu0
    %v195 = vpop.f32.mrf.mxu0
    %196 = vdwg.mxu0
    %197 = vmatprep.subr.bf16.mxu0 0
    %198 = vmatpush1.bf16.msra.mxu0 0
    %199 = vmatprep.subr.bf16.mxu0 0
    %200 = vmatpush1.bf16.msra.mxu0 0
    %201 = vmatprep.subr.bf16.mxu0 0
    %202 = vmatpush1.bf16.msra.mxu0 0
    %203 = vmatprep.subr.bf16.mxu0 0
    %204 = vmatpush1.bf16.msra.mxu0 0
    %205 = vmatprep.subr.bf16.mxu0 0
    %206 = vmatpush1.bf16.msra.mxu0 0
    %207 = vmatprep.subr.bf16.mxu0 0
    %208 = vmatpush1.bf16.msra.mxu0 0
    %209 = vmatprep.subr.bf16.mxu0 0
    %210 = vmatpush1.bf16.msra.mxu0 %v154
    %211 = vmatprep.subr.bf16.mxu0 0
    %212 = vmatpush1.bf16.msra.mxu0 %v135
    %213 = vmatprep.subr.bf16.mxu0 0
    %214 = vmatpush2.bf16.msra.mxu0 0
    %215 = vmatprep.subr.bf16.mxu0 0
    %216 = vmatpush2.bf16.msra.mxu0 0
    %217 = vmatprep.subr.bf16.mxu0 0
    %218 = vmatpush2.bf16.msra.mxu0 0
    %219 = vmatprep.subr.bf16.mxu0 0
    %220 = vmatpush2.bf16.msra.mxu0 0
    %221 = vmatprep.subr.bf16.mxu0 0
    %222 = vmatpush2.bf16.msra.mxu0 0
    %223 = vmatprep.subr.bf16.mxu0 0
    %224 = vmatpush2.bf16.msra.mxu0 0
    %225 = vmatprep.subr.bf16.mxu0 0
    %226 = vmatpush2.bf16.msra.mxu0 0
    %227 = vmatprep.subr.bf16.mxu0 0
    %228 = vmatpush2.bf16.msra.mxu0 0
    %229 = vmatprep.mubr.bf16.mxu0 0
    %230 = vmatmul.mubr.bf16.gmra.mxu0 %v144
    %v231 = vpop.f32.mrf.mxu0
    %v232 = vadd.f32 %v114, %v231
    %v233 = vpop.f32.mrf.mxu0
    %v234 = vpop.f32.mrf.mxu0
    %v235 = vpop.f32.mrf.mxu0
    %236 = vdwg.mxu0
    %v237 = vmax.f32 %v191, 0.0
    %v238 = vmax.f32 %v193, 0.0
    %v239 = vmax.f32 %v232, 0.0
    %v240 = vpack.c.bf16 %v237, %v237
    %v241 = vpack.c.bf16 %v238, %v238
    %v242 = vpack.c.bf16 %v239, %v239
    %v243 = vld [vmem:[#allocation6] sm:$0xf]
    %v244 = vld [vmem:[#allocation6 + $0x4] sm:$0xf]
    %v245 = vld [vmem:[#allocation6 + $0x8] sm:$0xf]
    %v246 = vld [vmem:[#allocation6 + $0xc] sm:$0xf]
    %v247 = vld [vmem:[#allocation6 + $0x10] sm:$0xf]
    %v248 = vld [vmem:[#allocation6 + $0x14] sm:$0xf]
    %v249 = vld [vmem:[#allocation6 + $0x18] sm:$0xf]
    %v250 = vld [vmem:[#allocation6 + $0x1c] sm:$0xf]
    %v251 = vld [vmem:[#allocation6 + $0x20] sm:$0xf]
    %v252 = vld [vmem:[#allocation6 + $0x24] sm:$0xf]
    %v253 = vld [vmem:[#allocation6 + $0x28] sm:$0xf]
    %v254 = vld [vmem:[#allocation6 + $0x2c] sm:$0xf]
    %v255 = vld [vmem:[#allocation6 + $0x30] sm:$0xf]
    %v256 = vld [vmem:[#allocation6 + $0x34] sm:$0xf]
    %v257 = vld [vmem:[#allocation6 + $0x38] sm:$0xf]
    %v258 = vld [vmem:[#allocation6 + $0x3c] sm:$0xf]
    %v259 = vld [vmem:[#allocation6 + $0x40] sm:$0xf]
    %v260 = vld [vmem:[#allocation6 + $0x44] sm:$0xf]
    %v261 = vld [vmem:[#allocation6 + $0x48] sm:$0xf]
    %v262 = vld [vmem:[#allocation6 + $0x4c] sm:$0xf]
    %v263 = vld [vmem:[#allocation6 + $0x50] sm:$0xf]
    %v264 = vld [vmem:[#allocation6 + $0x54] sm:$0xf]
    %v265 = vld [vmem:[#allocation6 + $0x58] sm:$0xf]
    %v266 = vld [vmem:[#allocation6 + $0x5c] sm:$0xf]
    %v267 = vld [vmem:[#allocation6 + $0x60] sm:$0xf]
    %v268 = vld [vmem:[#allocation6 + $0x64] sm:$0xf]
    %v269 = vld [vmem:[#allocation6 + $0x68] sm:$0xf]
    %v270 = vld [vmem:[#allocation6 + $0x6c] sm:$0xf]
    %v271 = vld [vmem:[#allocation6 + $0x70] sm:$0xf]
    %v272 = vld [vmem:[#allocation6 + $0x74] sm:$0xf]
    %v273 = vld [vmem:[#allocation6 + $0x78] sm:$0xf]
    %v274 = vld [vmem:[#allocation6 + $0x7c] sm:$0xf]
    %v275 = vld [vmem:[%s4] sm:$0x1]
    %v277 = vlaneseq
    %v278 = vshrl.u32 %v277, 7
    %v279 = vsub.s32 0, %v278
    %v280 = vrot.slane %v275, %v279
    %v314 = vunpack.c.l.b16 %v243
    %v315 = vunpack.c.l.b16 %v244
    %v316 = vunpack.c.l.b16 %v245
    %v317 = vunpack.c.l.b16 %v246
    %v318 = vunpack.c.l.b16 %v247
    %v319 = vunpack.c.l.b16 %v248
    %v320 = vunpack.c.l.b16 %v249
    %v321 = vunpack.c.l.b16 %v250
    %v322 = vunpack.c.l.b16 %v251
    %v323 = vunpack.c.l.b16 %v252
    %v324 = vunpack.c.l.b16 %v253
    %v325 = vunpack.c.l.b16 %v254
    %v326 = vunpack.c.l.b16 %v255
    %v327 = vunpack.c.l.b16 %v256
    %v328 = vunpack.c.l.b16 %v257
    %v329 = vunpack.c.l.b16 %v258
    %v330 = vunpack.c.l.b16 %v259
    %v331 = vunpack.c.l.b16 %v260
    %v332 = vunpack.c.l.b16 %v261
    %v333 = vunpack.c.l.b16 %v262
    %v334 = vunpack.c.l.b16 %v263
    %v335 = vunpack.c.l.b16 %v264
    %v336 = vunpack.c.l.b16 %v265
    %v337 = vunpack.c.l.b16 %v266
    %v338 = vunpack.c.l.b16 %v267
    %v339 = vunpack.c.l.b16 %v268
    %v340 = vunpack.c.l.b16 %v269
    %v341 = vunpack.c.l.b16 %v270
    %v342 = vunpack.c.l.b16 %v271
    %v343 = vunpack.c.l.b16 %v272
    %v344 = vunpack.c.l.b16 %v273
    %v345 = vunpack.c.l.b16 %v274
    %v346 = vpack.c.b16 %v315, %v314
    %v347 = vpack.c.b16 %v317, %v316
    %v348 = vpack.c.b16 %v319, %v318
    %v349 = vpack.c.b16 %v321, %v320
    %v350 = vpack.c.b16 %v323, %v322
    %v351 = vpack.c.b16 %v325, %v324
    %v352 = vpack.c.b16 %v327, %v326
    %v353 = vpack.c.b16 %v329, %v328
    %v354 = vpack.c.b16 %v331, %v330
    %v355 = vpack.c.b16 %v333, %v332
    %v356 = vpack.c.b16 %v335, %v334
    %v357 = vpack.c.b16 %v337, %v336
    %v358 = vpack.c.b16 %v339, %v338
    %v359 = vpack.c.b16 %v341, %v340
    %v360 = vpack.c.b16 %v343, %v342
    %v361 = vpack.c.b16 %v345, %v344
    %378 = vmatprep.subr.bf16.mxu0 0
    %379 = vmatpush1.bf16.msra.mxu0 %v353
    %380 = vmatprep.subr.bf16.mxu0 0
    %381 = vmatpush1.bf16.msra.mxu0 %v352
    %382 = vmatprep.subr.bf16.mxu0 0
    %383 = vmatpush1.bf16.msra.mxu0 %v351
    %384 = vmatprep.subr.bf16.mxu0 0
    %385 = vmatpush1.bf16.msra.mxu0 %v350
    %386 = vmatprep.subr.bf16.mxu0 0
    %387 = vmatpush1.bf16.msra.mxu0 %v349
    %388 = vmatprep.subr.bf16.mxu0 0
    %389 = vmatpush1.bf16.msra.mxu0 %v348
    %390 = vmatprep.subr.bf16.mxu0 0
    %391 = vmatpush1.bf16.msra.mxu0 %v347
    %392 = vmatprep.subr.bf16.mxu0 0
    %393 = vmatpush1.bf16.msra.mxu0 %v346
    %394 = vmatprep.subr.bf16.mxu0 0
    %395 = vmatpush2.bf16.msra.mxu0 %v361
    %396 = vmatprep.subr.bf16.mxu0 0
    %397 = vmatpush2.bf16.msra.mxu0 %v360
    %398 = vmatprep.subr.bf16.mxu0 0
    %399 = vmatpush2.bf16.msra.mxu0 %v359
    %400 = vmatprep.subr.bf16.mxu0 0
    %401 = vmatpush2.bf16.msra.mxu0 %v358
    %402 = vmatprep.subr.bf16.mxu0 0
    %403 = vmatpush2.bf16.msra.mxu0 %v357
    %404 = vmatprep.subr.bf16.mxu0 0
    %405 = vmatpush2.bf16.msra.mxu0 %v356
    %406 = vmatprep.subr.bf16.mxu0 0
    %407 = vmatpush2.bf16.msra.mxu0 %v355
    %408 = vmatprep.subr.bf16.mxu0 0
    %409 = vmatpush2.bf16.msra.mxu0 %v354
    %410 = vmatprep.mubr.bf16.mxu0 %v241
    %411 = vmatmul.mubr.bf16.gmra.mxu0 %v240
    %v412 = vpop.f32.mrf.mxu0
    %v413 = vadd.f32 %v280, %v412
    %v414 = vpop.f32.mrf.mxu0
    %v415 = vpop.f32.mrf.mxu0
    %v416 = vpop.f32.mrf.mxu0
    %417 = vdwg.mxu0
    %v418 = vmax.f32 %v413, 0.0
    %v419 = vpack.c.bf16 %v418, %v418
    %v420 = vld [vmem:[#allocation8] sm:$0xf]
    %v421 = vld [vmem:[#allocation8 + $0x4] sm:$0xf]
    %v422 = vld [vmem:[#allocation8 + $0x8] sm:$0xf]
    %v423 = vld [vmem:[#allocation8 + $0xc] sm:$0xf]
    %v424 = vld [vmem:[#allocation8 + $0x10] sm:$0xf]
    %v425 = vld [vmem:[#allocation8 + $0x14] sm:$0xf]
    %v426 = vld [vmem:[#allocation8 + $0x18] sm:$0xf]
    %v427 = vld [vmem:[#allocation8 + $0x1c] sm:$0xf]
    %v428 = vld [vmem:[#allocation8 + $0x20] sm:$0xf]
    %v429 = vld [vmem:[#allocation8 + $0x24] sm:$0xf]
    %v430 = vld [vmem:[#allocation8 + $0x28] sm:$0xf]
    %v431 = vld [vmem:[#allocation8 + $0x2c] sm:$0xf]
    %v432 = vld [vmem:[#allocation8 + $0x30] sm:$0xf]
    %v433 = vld [vmem:[#allocation8 + $0x34] sm:$0xf]
    %v434 = vld [vmem:[#allocation8 + $0x38] sm:$0xf]
    %v435 = vld [vmem:[#allocation8 + $0x3c] sm:$0xf]
    %v436 = vld [vmem:[#allocation9] sm:$0xf]
    %v437 = vld [vmem:[#allocation9 + $0x4] sm:$0xf]
    %v438 = vld [vmem:[#allocation9 + $0x8] sm:$0xf]
    %v439 = vld [vmem:[#allocation9 + $0xc] sm:$0xf]
    %v440 = vld [vmem:[#allocation9 + $0x10] sm:$0xf]
    %v441 = vld [vmem:[#allocation9 + $0x14] sm:$0xf]
    %v442 = vld [vmem:[#allocation9 + $0x18] sm:$0xf]
    %v443 = vld [vmem:[#allocation9 + $0x1c] sm:$0xf]
    %v444 = vld [vmem:[#allocation9 + $0x20] sm:$0xf]
    %v445 = vld [vmem:[#allocation9 + $0x24] sm:$0xf]
    %v446 = vld [vmem:[#allocation9 + $0x28] sm:$0xf]
    %v447 = vld [vmem:[#allocation9 + $0x2c] sm:$0xf]
    %v448 = vld [vmem:[#allocation9 + $0x30] sm:$0xf]
    %v449 = vld [vmem:[#allocation9 + $0x34] sm:$0xf]
    %v450 = vld [vmem:[#allocation9 + $0x38] sm:$0xf]
    %v451 = vld [vmem:[#allocation9 + $0x3c] sm:$0xf]
    %v468 = vunpack.c.l.b16 %v436
    %v469 = vunpack.c.l.b16 %v437
    %v470 = vunpack.c.l.b16 %v438
    %v471 = vunpack.c.l.b16 %v439
    %v472 = vunpack.c.l.b16 %v440
    %v473 = vunpack.c.l.b16 %v441
    %v474 = vunpack.c.l.b16 %v442
    %v475 = vunpack.c.l.b16 %v443
    %v476 = vunpack.c.l.b16 %v444
    %v477 = vunpack.c.l.b16 %v445
    %v478 = vunpack.c.l.b16 %v446
    %v479 = vunpack.c.l.b16 %v447
    %v480 = vunpack.c.l.b16 %v448
    %v481 = vunpack.c.l.b16 %v449
    %v482 = vunpack.c.l.b16 %v450
    %v483 = vunpack.c.l.b16 %v451
    %v484 = vpack.c.b16 %v469, %v468
    %v485 = vpack.c.b16 %v471, %v470
    %v486 = vpack.c.b16 %v473, %v472
    %v487 = vpack.c.b16 %v475, %v474
    %v488 = vpack.c.b16 %v477, %v476
    %v489 = vpack.c.b16 %v479, %v478
    %v490 = vpack.c.b16 %v481, %v480
    %v491 = vpack.c.b16 %v483, %v482
    %500 = vmatprep.subr.bf16.mxu0 0
    %501 = vmatpush1.bf16.msra.mxu0 %v491
    %502 = vmatprep.subr.bf16.mxu0 0
    %503 = vmatpush1.bf16.msra.mxu0 %v490
    %504 = vmatprep.subr.bf16.mxu0 0
    %505 = vmatpush1.bf16.msra.mxu0 %v489
    %506 = vmatprep.subr.bf16.mxu0 0
    %507 = vmatpush1.bf16.msra.mxu0 %v488
    %508 = vmatprep.subr.bf16.mxu0 0
    %509 = vmatpush1.bf16.msra.mxu0 %v487
    %510 = vmatprep.subr.bf16.mxu0 0
    %511 = vmatpush1.bf16.msra.mxu0 %v486
    %512 = vmatprep.subr.bf16.mxu0 0
    %513 = vmatpush1.bf16.msra.mxu0 %v485
    %514 = vmatprep.subr.bf16.mxu0 0
    %515 = vmatpush1.bf16.msra.mxu0 %v484
    %516 = vmatprep.subr.bf16.mxu0 0
    %517 = vmatpush2.bf16.msra.mxu0 0
    %518 = vmatprep.subr.bf16.mxu0 0
    %519 = vmatpush2.bf16.msra.mxu0 0
    %520 = vmatprep.subr.bf16.mxu0 0
    %521 = vmatpush2.bf16.msra.mxu0 0
    %522 = vmatprep.subr.bf16.mxu0 0
    %523 = vmatpush2.bf16.msra.mxu0 0
    %524 = vmatprep.subr.bf16.mxu0 0
    %525 = vmatpush2.bf16.msra.mxu0 0
    %526 = vmatprep.subr.bf16.mxu0 0
    %527 = vmatpush2.bf16.msra.mxu0 0
    %528 = vmatprep.subr.bf16.mxu0 0
    %529 = vmatpush2.bf16.msra.mxu0 0
    %530 = vmatprep.subr.bf16.mxu0 0
    %531 = vmatpush2.bf16.msra.mxu0 0
    %532 = vmatprep.mubr.bf16.mxu0 0
    %533 = vmatmul.mubr.bf16.gmra.mxu0 %v242
    %v534 = vpop.f32.mrf.mxu0
    %v535 = vadd.f32 0.0, %v534
    %v536 = vpop.f32.mrf.mxu0
    %v537 = vpop.f32.mrf.mxu0
    %v538 = vpop.f32.mrf.mxu0
    %539 = vdwg.mxu0
    %v556 = vunpack.c.l.b16 %v420
    %v557 = vunpack.c.l.b16 %v421
    %v558 = vunpack.c.l.b16 %v422
    %v559 = vunpack.c.l.b16 %v423
    %v560 = vunpack.c.l.b16 %v424
    %v561 = vunpack.c.l.b16 %v425
    %v562 = vunpack.c.l.b16 %v426
    %v563 = vunpack.c.l.b16 %v427
    %v564 = vunpack.c.l.b16 %v428
    %v565 = vunpack.c.l.b16 %v429
    %v566 = vunpack.c.l.b16 %v430
    %v567 = vunpack.c.l.b16 %v431
    %v568 = vunpack.c.l.b16 %v432
    %v569 = vunpack.c.l.b16 %v433
    %v570 = vunpack.c.l.b16 %v434
    %v571 = vunpack.c.l.b16 %v435
    %v572 = vpack.c.b16 %v557, %v556
    %v573 = vpack.c.b16 %v559, %v558
    %v574 = vpack.c.b16 %v561, %v560
    %v575 = vpack.c.b16 %v563, %v562
    %v576 = vpack.c.b16 %v565, %v564
    %v577 = vpack.c.b16 %v567, %v566
    %v578 = vpack.c.b16 %v569, %v568
    %v579 = vpack.c.b16 %v571, %v570
    %588 = vmatprep.subr.bf16.mxu0 0
    %589 = vmatpush1.bf16.msra.mxu0 %v579
    %590 = vmatprep.subr.bf16.mxu0 0
    %591 = vmatpush1.bf16.msra.mxu0 %v578
    %592 = vmatprep.subr.bf16.mxu0 0
    %593 = vmatpush1.bf16.msra.mxu0 %v577
    %594 = vmatprep.subr.bf16.mxu0 0
    %595 = vmatpush1.bf16.msra.mxu0 %v576
    %596 = vmatprep.subr.bf16.mxu0 0
    %597 = vmatpush1.bf16.msra.mxu0 %v575
    %598 = vmatprep.subr.bf16.mxu0 0
    %599 = vmatpush1.bf16.msra.mxu0 %v574
    %600 = vmatprep.subr.bf16.mxu0 0
    %601 = vmatpush1.bf16.msra.mxu0 %v573
    %602 = vmatprep.subr.bf16.mxu0 0
    %603 = vmatpush1.bf16.msra.mxu0 %v572
    %604 = vmatprep.subr.bf16.mxu0 0
    %605 = vmatpush2.bf16.msra.mxu0 0
    %606 = vmatprep.subr.bf16.mxu0 0
    %607 = vmatpush2.bf16.msra.mxu0 0
    %608 = vmatprep.subr.bf16.mxu0 0
    %609 = vmatpush2.bf16.msra.mxu0 0
    %610 = vmatprep.subr.bf16.mxu0 0
    %611 = vmatpush2.bf16.msra.mxu0 0
    %612 = vmatprep.subr.bf16.mxu0 0
    %613 = vmatpush2.bf16.msra.mxu0 0
    %614 = vmatprep.subr.bf16.mxu0 0
    %615 = vmatpush2.bf16.msra.mxu0 0
    %616 = vmatprep.subr.bf16.mxu0 0
    %617 = vmatpush2.bf16.msra.mxu0 0
    %618 = vmatprep.subr.bf16.mxu0 0
    %619 = vmatpush2.bf16.msra.mxu0 0
    %620 = vmatprep.mubr.bf16.mxu0 0
    %621 = vmatmul.mubr.bf16.gmra.mxu0 %v419
    %v622 = vpop.f32.mrf.mxu0
    %v623 = vadd.f32 %v535, %v622
    %v624 = vpop.f32.mrf.mxu0
    %v625 = vpop.f32.mrf.mxu0
    %v626 = vpop.f32.mrf.mxu0
    %627 = vdwg.mxu0
    %v628 = vld [vmem:[%s7] sm:$0x1]
    %v630 = vlaneseq
    %v631 = vshrl.u32 %v630, 7
    %v632 = vsub.s32 0, %v631
    %v633 = vrot.slane %v628, %v632
    %v635 = vadd.f32 %v623, %v633
    %v636 = vmax.f32 %v635, 0.0
    %v637 = vld [vmem:[%s8] sm:$0x1]
    %v639 = vlaneseq
    %v640 = vshrl.u32 %v639, 7
    %v641 = vsub.s32 0, %v640
    %v642 = vrot.slane %v637, %v641
    %v644 = vmul.f32 %v636, %v642
    %v645 = vsel %vm146, %v644, 0.0
    %646 = vadd.xlane.f32.xlu0 %v645
    %v647 = vpop.xlane.xlu0 %646
    %v648 = vld [vmem:[#allocation2] sm:$0x1]
    %650 = vset.pattern.permute.xlu0 0
    %651 = vperm.xlu0 %650, %v648
    %v652 = vpop.permute.xlu0 %651
    %v654 = vlaneseq
    %v655 = vshrl.u32 %v654, 7
    %v656 = vsub.s32 0, %v655
    %v657 = vrot.slane %v652, %v656
    %v658 = vadd.f32 %v647, %v657
    %v660 = vlaneseq
    %v661 = vand.u32 %v660, 127
    %v662 = vlaneseq
    %v663 = vshrl.u32 %v662, 7
    %v664 = vsub.s32 %v661, %v663
    %v665 = vrot.slane %v658, %v664
    %vm667 = vcmask 8192
    %668 = vst.msk [vmem:[#allocation11] sm:$0x1] %vm667, %v665
    // Predicated region
    $region58: #{tpu_custom_call.1} parent=1 // pred_check
      _
    $region59: #{tpu_custom_call.1} parent=1 // pred_check_branch
      %670 = sbr.rel (0) target = $region61
    $region60: #{tpu_custom_call.1} parent=1 // pred_region
      %s672 = ssub.s32 16, 16
      %673 = vsyncadd [#allocation5], %s672
      %s675 = sshll.u32 [#allocation11], 4
      %s676 = int_to_ptr.vmem [resolvable:$true] %s675
      %678 = dma.vmem_to_hbm [thread:$0]  %s676, 16, %s10, [#allocation5]
    $region61: #{tpu_custom_call.1} parent=1 // pred_fallthru
      _
    // Predicated region
    $region62: #{tpu_custom_call.1} parent=1 // pred_check
      _
    $region63: #{tpu_custom_call.1} parent=1 // pred_check_branch
      %680 = sbr.rel (0) target = $region65
    $region64: #{tpu_custom_call.1} parent=1 // pred_region
      %681 = dma.done [#allocation5], 16
    $region65: #{tpu_custom_call.1} parent=1 // pred_fallthru
      _
    %682 = vsyncpa [#allocation4], 1
    %683 = vsyncpa [#allocation7], 1
    %684 = vsyncpa [#allocation10], 1
    %685 = vsyncpa [#allocation5], 1

</llo_original>
